<compile_context>
chip_gen: v6e
topology: v6e:2x2x1
jax: 0.10.0
libtpu: 0.0.40
codegen_flags: <defaults>
</compile_context>

<pallas_src>
import jax
import jax.numpy as jnp
from jax import lax
from jax.experimental import pallas as pl
from jax.experimental.pallas import tpu as pltpu

n_embd = 192
block_size = 128


def _head_kernel(x_ref, w_ref, o_ref):
    # x_ref: (Bblk, T, C)   w_ref: (C, 3H) fused [k | q | v]   o_ref: (Bblk, T, H)
    Bblk, T, C = x_ref.shape
    H = w_ref.shape[-1] // 3
    scale = jnp.float32(C) ** -0.5          # module uses C**-0.5 (C == n_embd)

    # ---- fused K/Q/V projection: one MXU matmul with N = 3H -----------------
    # bf16 MXU inputs, f32 accumulation (native bf16 on v6e/v7x, 2x on v5e).
    x2 = x_ref[...].reshape(Bblk * T, C).astype(jnp.bfloat16)
    w = w_ref[...].astype(jnp.bfloat16)
    qkv = jnp.dot(x2, w, preferred_element_type=jnp.float32)      # (Bblk*T, 3H)
    qkv = qkv.reshape(Bblk, T, 3 * H)

    k = qkv[..., 0 * H:1 * H]
    q = qkv[..., 1 * H:2 * H] * scale        # fold scale into q: T*H, not T*T
    v = qkv[..., 2 * H:3 * H]

    # ---- attention scores: contract head axes directly (no explicit k.T) ----
    scores = jnp.einsum(
        "bqh,bkh->bqk",
        q.astype(jnp.bfloat16), k.astype(jnp.bfloat16),
        preferred_element_type=jnp.float32)                        # (Bblk, T, T)

    # causal mask (tril): keep key j <= query i; large finite value, not -inf
    qi = lax.broadcasted_iota(jnp.int32, (Bblk, T, T), 1)
    kj = lax.broadcasted_iota(jnp.int32, (Bblk, T, T), 2)
    scores = jnp.where(kj <= qi, scores, jnp.float32(-1e30))

    # ---- softmax over dim=1 (the *query* axis), matching the module ---------
    # Elementwise softmax kept in f32 (v5e VPU/EUP have no bf16).
    m = jnp.max(scores, axis=1, keepdims=True)                     # (Bblk, 1, T)
    e = jnp.exp(scores - m)
    denom = jnp.sum(e, axis=1, keepdims=True)                      # (Bblk, 1, T)
    p = e * pl.reciprocal(denom, approx=True)                      # EUP slot

    # (dropout == identity in eval mode)

    # ---- weighted sum of values ---------------------------------------------
    out = jnp.einsum(
        "bqk,bkh->bqh",
        p.astype(jnp.bfloat16), v.astype(jnp.bfloat16),
        preferred_element_type=jnp.float32)                        # (Bblk, T, H)
    o_ref[...] = out.astype(o_ref.dtype)


def head_forward(x, w_qkv, *, batch_block=None):
    """x: (B, T, C) f32; w_qkv: (C, 3H) fused [k | q | v]. Returns (B, T, H)."""
    B, T, C = x.shape
    H = w_qkv.shape[1] // 3
    if batch_block is None:
        # Amortize per-grid-step overhead across batch elements, but keep at
        # least 2 grid points when B allows so v7x's 2 TCs both get work.
        batch_block = max(1, B // 2)
    assert B % batch_block == 0
    grid = (B // batch_block,)

    return pl.pallas_call(
        _head_kernel,
        out_shape=jax.ShapeDtypeStruct((B, T, H), x.dtype),
        grid_spec=pltpu.PrefetchScalarGridSpec(
            num_scalar_prefetch=0,
            grid=grid,
            in_specs=[
                pl.BlockSpec((batch_block, T, C), lambda b: (b, 0, 0)),
                pl.BlockSpec((C, 3 * H), lambda b: (0, 0)),
            ],
            out_specs=pl.BlockSpec((batch_block, T, H), lambda b: (b, 0, 0)),
        ),
        compiler_params=pltpu.CompilerParams(
            dimension_semantics=("parallel",)),
    )(x, w_qkv)


def _reference(x, wk, wq, wv):
    # plain-JAX reference mirroring the PyTorch forward (eval mode), f32
    B, T, C = x.shape
    k = x @ wk
    q = x @ wq
    v = x @ wv
    scores = jnp.einsum("btd,bsd->bts", q, k) * (C ** -0.5)
    tril = jnp.tril(jnp.ones((T, T), dtype=bool))
    scores = jnp.where(tril[None, :, :], scores, -jnp.inf)
    w = jax.nn.softmax(scores, axis=1)   # dim=1, exactly as in the module
    return jnp.einsum("bts,bsh->bth", w, v)


if __name__ == "__main__":
    B, T, C = 2, 8, n_embd       # T <= block_size
    head_size = 32

    key = jax.random.PRNGKey(0)
    kx, kk, kq, kv = jax.random.split(key, 4)

    x = jax.random.normal(kx, (B, T, C), dtype=jnp.float32)
    # deterministic nn.Linear-style init: U(-1/sqrt(C), 1/sqrt(C)), stored (C, H)
    bound = 1.0 / (C ** 0.5)
    wk = jax.random.uniform(kk, (C, head_size), jnp.float32, -bound, bound)
    wq = jax.random.uniform(kq, (C, head_size), jnp.float32, -bound, bound)
    wv = jax.random.uniform(kv, (C, head_size), jnp.float32, -bound, bound)

    # fused projection weight [k | q | v]: (C, 3H)
    w_qkv = jnp.concatenate([wk, wq, wv], axis=1)

    out = head_forward(x, w_qkv)
    out = jax.block_until_ready(out)

    ref = _reference(x, wk, wq, wv)
    assert out.shape == (B, T, head_size)
    # bf16 MXU inputs (f32 accumulation) + approx reciprocal -> loose tolerance
    max_err = float(jnp.max(jnp.abs(out - ref)))
    assert jnp.allclose(out, ref, atol=3e-2, rtol=3e-2), max_err
    print("KERNEL_OK")
</pallas_src>

<mosaic_0001>
module attributes {stable_mosaic.version = 11 : i64} {
  func.func @_head_kernel(%arg0: i32, %arg1: memref<1x8x192xf32, #tpu.memory_space<vmem>>, %arg2: memref<192x96xf32, #tpu.memory_space<vmem>>, %arg3: memref<1x8x32xf32, #tpu.memory_space<vmem>>) attributes {dimension_semantics = [#tpu.dimension_semantics<parallel>], iteration_bounds = array<i64: 2>, scalar_prefetch = 0 : i64, scratch_operands = 0 : i64, tpu.core_type = #tpu.core_type<tc>, window_params = [{transform_indices = @transform_0, window_bounds = array<i64: 1, 8, 192>}, {pipeline_mode = #tpu.pipeline_mode<synchronous>, transform_indices = @transform_1, window_bounds = array<i64: 192, 96>}, {transform_indices = @transform_2, window_bounds = array<i64: 1, 8, 32>}]} {
    %cst = arith.constant 1.920000e+02 : f32
    %cst_0 = arith.constant -5.000000e-01 : f32
    %0 = math.powf %cst, %cst_0 : f32
    %c0 = arith.constant 0 : index
    %c0_1 = arith.constant 0 : index
    %c0_2 = arith.constant 0 : index
    %1 = vector.load %arg1[%c0, %c0_1, %c0_2] : memref<1x8x192xf32, #tpu.memory_space<vmem>>, vector<1x8x192xf32>
    %2 = vector.shape_cast %1 : vector<1x8x192xf32> to vector<8x192xf32>
    %3 = arith.truncf %2 : vector<8x192xf32> to vector<8x192xbf16>
    %c0_3 = arith.constant 0 : index
    %c0_4 = arith.constant 0 : index
    %4 = vector.load %arg2[%c0_3, %c0_4] : memref<192x96xf32, #tpu.memory_space<vmem>>, vector<192x96xf32>
    %5 = arith.truncf %4 : vector<192x96xf32> to vector<192x96xbf16>
    %cst_5 = arith.constant dense<0.000000e+00> : vector<8x96xf32>
    %6 = tpu.matmul %3, %5, %cst_5 {dimension_numbers = #tpu.dot_dimension_numbers<[1], [0], [0], [1], [0, 0, 1, 1], [], []>} : vector<8x192xbf16>, vector<192x96xbf16>, vector<8x96xf32> -> vector<8x96xf32>
    %7 = vector.shape_cast %6 : vector<8x96xf32> to vector<1x8x96xf32>
    %8 = vector.extract_strided_slice %7 {offsets = [0, 0, 0], sizes = [1, 8, 32], strides = [1, 1, 1]} : vector<1x8x96xf32> to vector<1x8x32xf32>
    %9 = vector.extract_strided_slice %7 {offsets = [0, 0, 32], sizes = [1, 8, 32], strides = [1, 1, 1]} : vector<1x8x96xf32> to vector<1x8x32xf32>
    %10 = vector.broadcast %0 : f32 to vector<1x8x32xf32>
    %11 = arith.mulf %9, %10 : vector<1x8x32xf32>
    %12 = vector.extract_strided_slice %7 {offsets = [0, 0, 64], sizes = [1, 8, 32], strides = [1, 1, 1]} : vector<1x8x96xf32> to vector<1x8x32xf32>
    %13 = arith.truncf %11 : vector<1x8x32xf32> to vector<1x8x32xbf16>
    %14 = arith.truncf %8 : vector<1x8x32xf32> to vector<1x8x32xbf16>
    "tpu.trace_start"() <{level = 10 : i32, message = "bqh,bkh->bqk"}> : () -> ()
    %cst_6 = arith.constant dense<0.000000e+00> : vector<1x8x8xf32>
    %15 = tpu.matmul %13, %14, %cst_6 {dimension_numbers = #tpu.dot_dimension_numbers<[2], [2], [1], [1], [0, 0, 0, 1, 1, 1], [0], [0]>} : vector<1x8x32xbf16>, vector<1x8x32xbf16>, vector<1x8x8xf32> -> vector<1x8x8xf32>
    "tpu.trace_stop"() : () -> ()
    %16 = tpu.iota {dimensions = array<i32: 1>} : vector<1x8x8xi32>
    %17 = tpu.iota {dimensions = array<i32: 2>} : vector<1x8x8xi32>
    %18 = arith.cmpi sle, %17, %16 : vector<1x8x8xi32>
    %cst_7 = arith.constant -1.000000e+30 : f32
    %19 = vector.broadcast %cst_7 : f32 to vector<1x8x8xf32>
    %20 = arith.select %18, %15, %19 : vector<1x8x8xi1>, vector<1x8x8xf32>
    %cst_8 = arith.constant dense<0xFF800000> : vector<1x8xf32>
    %21 = vector.multi_reduction <maximumf>, %20, %cst_8 [1] : vector<1x8x8xf32> to vector<1x8xf32>
    %22 = vector.shape_cast %21 : vector<1x8xf32> to vector<1x1x8xf32>
    %23 = vector.broadcast %22 : vector<1x1x8xf32> to vector<1x8x8xf32>
    %24 = arith.subf %20, %23 : vector<1x8x8xf32>
    %25 = math.exp %24 : vector<1x8x8xf32>
    %cst_9 = arith.constant dense<0.000000e+00> : vector<1x8xf32>
    %26 = vector.multi_reduction <add>, %25, %cst_9 [1] : vector<1x8x8xf32> to vector<1x8xf32>
    %27 = vector.shape_cast %26 : vector<1x8xf32> to vector<1x1x8xf32>
    %28 = tpu.reciprocal %27 {approx = true} : vector<1x1x8xf32> -> vector<1x1x8xf32>
    %29 = vector.broadcast %28 : vector<1x1x8xf32> to vector<1x8x8xf32>
    %30 = arith.mulf %25, %29 : vector<1x8x8xf32>
    %31 = arith.truncf %30 : vector<1x8x8xf32> to vector<1x8x8xbf16>
    %32 = arith.truncf %12 : vector<1x8x32xf32> to vector<1x8x32xbf16>
    "tpu.trace_start"() <{level = 10 : i32, message = "bqk,bkh->bqh"}> : () -> ()
    %cst_10 = arith.constant dense<0.000000e+00> : vector<1x8x32xf32>
    %33 = tpu.matmul %31, %32, %cst_10 {dimension_numbers = #tpu.dot_dimension_numbers<[2], [1], [1], [2], [0, 0, 0, 1, 1, 2], [0], [0]>} : vector<1x8x8xbf16>, vector<1x8x32xbf16>, vector<1x8x32xf32> -> vector<1x8x32xf32>
    "tpu.trace_stop"() : () -> ()
    %c0_11 = arith.constant 0 : index
    %c0_12 = arith.constant 0 : index
    %c0_13 = arith.constant 0 : index
    %34 = vector.load %arg3[%c0_11, %c0_12, %c0_13] : memref<1x8x32xf32, #tpu.memory_space<vmem>>, vector<1x8x32xf32>
    tpu.vector_store %arg3[%c0_11, %c0_12, %c0_13], %33 {strides = array<i32>} : memref<1x8x32xf32, #tpu.memory_space<vmem>>, vector<1x8x32xf32>,
    return
  }
  func.func @transform_0(%arg0: i32) -> (i32, i32, i32) {
    %c0_i32 = arith.constant 0 : i32
    %c0_i32_0 = arith.constant 0 : i32
    %c0_i32_1 = arith.constant 0 : i32
    return %arg0, %c0_i32, %c0_i32_0 : i32, i32, i32
  }
  func.func @transform_1(%arg0: i32) -> (i32, i32) {
    %c0_i32 = arith.constant 0 : i32
    %c0_i32_0 = arith.constant 0 : i32
    %c0_i32_1 = arith.constant 0 : i32
    return %c0_i32, %c0_i32_0 : i32, i32
  }
  func.func @transform_2(%arg0: i32) -> (i32, i32, i32) {
    %c0_i32 = arith.constant 0 : i32
    %c0_i32_0 = arith.constant 0 : i32
    %c0_i32_1 = arith.constant 0 : i32
    return %arg0, %c0_i32, %c0_i32_0 : i32, i32, i32
  }
}

</mosaic_0001>

<llo_original>
// kernel: tpu_custom_call.1
$region0: #{tpu_custom_call.1}
  #allocation0 [shape = 'u32[]', space=smem, size = 0x4, offset = 0x4, fixed_abs, tag = 'smem constant byte address 0x4 - core index']
  #allocation1 [shape = 'u32[144,128]{1,0:T(1,128)}', space=vmem, size = 0x12000, scoped, tag = 'internal scratch']
  %s0 = inlined_call_operand.hbm [shape: f32[2,8,192], index: 0, kind: input, shape index: {}]
  %s1 = inlined_call_operand.hbm [shape: f32[192,96], index: 1, kind: input, shape index: {}]
  %s2 = inlined_call_operand.hbm [shape: f32[2,8,32], index: 2, kind: output, shape index: {}]
  %s3 = sld [smem:[#allocation0]]
  $region49: #{tpu_custom_call.1} parent=0
    _
  %s5 = ssub.s32 1, %s3
  %s6 = scalar_select 0, %s5, %s3
  $region1: #{tpu_custom_call.1} parent=0
    #allocation2 [shape = 'u8[16384]{0}', space=vmem, size = 0x4000, scoped, tag = 'input window, operand 0']
    #allocation3 [shape = 's32[2]{0}', space=sflag, size = 0x8, scoped, tag = 'scoped memory for tpu_custom_call.1']
    #allocation4 [shape = 's32[2]{0}', space=sflag, size = 0x8, scoped, tag = 'scoped memory for tpu_custom_call.1']
    #allocation5 [shape = 'u8[98304]{0}', space=vmem, size = 0x18000, scoped, tag = 'input window, operand 1, single buffered']
    #allocation6 [shape = 's32[1]{0}', space=sflag, size = 0x4, scoped, tag = 'scoped memory for tpu_custom_call.1']
    #allocation7 [shape = 'u8[8192]{0}', space=vmem, size = 0x2000, scoped, tag = 'output window, operand 0']
    %7 = vsyncpa [#allocation3], 0
    %s8 = scalar_lea.sflag [#allocation3], 1
    %9 = vsyncpa %s8, 0
    %10 = vsyncpa [#allocation6], 0
    %11 = vsyncpa [#allocation4], 0
    %s12 = scalar_lea.sflag [#allocation4], 1
    %13 = vsyncpa %s12, 0
    loop: start=0, step=1, limit=4
    $region2: #{tpu_custom_call.1} parent=1 // loop_pre_header
      _
    $region3: #{tpu_custom_call.1} parent=1 // loop_header
      %s15 = sphi 0, %s19
      %p16 = scmp.ge.s32.totalorder %s15, 4
      %s25 = sphi 0, %s27
      %s28 = sphi 0, %s25
      %s29 = sphi 0, %s28
      %s45 = sphi 0, %s29
      %s49 = sphi 0, %s49
      %s51 = sphi 0, %s49
      %s52 = sphi 0, %s51
      %s66 = sphi 0, %s52
      %s72 = sphi 0, %s74
      %s75 = sphi 0, %s72
      %s76 = sphi 0, %s75
      %s92 = sphi 0, %s76
    $region4: #{tpu_custom_call.1} parent=1 // loop_header_branch
      %18 = sbr.rel (%p16) target = $region8
    $region5: #{tpu_custom_call.1} parent=1 // loop_body
      %s20 = ssub.s32 %s15, 1
      %s21 = ssub.s32 %s15, 2
      %s22 = sadd.s32 %s15, 1
      %s23 = ssub.s32 %s15, %s22
      %p24 = scmp.eq.s32.totalorder %s23, 0
      %s26 = sadd.s32 %s25, 1
      %s27 = scalar_select %p24, %s25, %s26
      %p30 = pneg %p24
      %p31 = scmp.eq.s32.totalorder %s15, 1
      %p32 = por %p30, %p31
      %p33 = scmp.ne.s32.totalorder %s25, %s28
      %p34 = scmp.eq.s32.totalorder %s15, 0
      %p35 = por %p33, %p34
      %p36 = scmp.ne.s32.totalorder %s25, %s28
      %p37 = scmp.eq.s32.totalorder %s20, 1
      %p38 = por %p36, %p37
      %p39 = scmp.ne.s32.totalorder %s28, %s29
      %p40 = scmp.eq.s32.totalorder %s20, 0
      %p41 = por %p39, %p40
      %p42 = scmp.ne.s32.totalorder %s28, %s29
      %p43 = scmp.eq.s32.totalorder %s21, 1
      %p44 = por %p42, %p43
      %p46 = scmp.ne.s32.totalorder %s29, %s45
      %p47 = scmp.eq.s32.totalorder %s21, 0
      %p48 = por %p46, %p47
      %s50 = sadd.s32 %s49, 1
      %p53 = scmp.eq.s32.totalorder %s15, 1
      %p54 = scmp.ne.s32.totalorder %s49, %s51
      %p55 = scmp.eq.s32.totalorder %s15, 0
      %p56 = por %p54, %p55
      %p57 = scmp.ne.s32.totalorder %s49, %s51
      %p58 = scmp.eq.s32.totalorder %s20, 1
      %p59 = por %p57, %p58
      %p60 = scmp.ne.s32.totalorder %s51, %s52
      %p61 = scmp.eq.s32.totalorder %s20, 0
      %p62 = por %p60, %p61
      %p63 = scmp.ne.s32.totalorder %s51, %s52
      %p64 = scmp.eq.s32.totalorder %s21, 1
      %p65 = por %p63, %p64
      %p67 = scmp.ne.s32.totalorder %s52, %s66
      %p68 = scmp.eq.s32.totalorder %s21, 0
      %p69 = por %p67, %p68
      %s70 = ssub.s32 %s15, %s22
      %p71 = scmp.eq.s32.totalorder %s70, 0
      %s73 = sadd.s32 %s72, 1
      %s74 = scalar_select %p71, %s72, %s73
      %p77 = pneg %p71
      %p78 = scmp.eq.s32.totalorder %s15, 1
      %p79 = por %p77, %p78
      %p80 = scmp.ne.s32.totalorder %s72, %s75
      %p81 = scmp.eq.s32.totalorder %s15, 0
      %p82 = por %p80, %p81
      %p83 = scmp.ne.s32.totalorder %s72, %s75
      %p84 = scmp.eq.s32.totalorder %s20, 1
      %p85 = por %p83, %p84
      %p86 = scmp.ne.s32.totalorder %s75, %s76
      %p87 = scmp.eq.s32.totalorder %s20, 0
      %p88 = por %p86, %p87
      %p89 = scmp.ne.s32.totalorder %s75, %s76
      %p90 = scmp.eq.s32.totalorder %s21, 1
      %p91 = por %p89, %p90
      %p93 = scmp.ne.s32.totalorder %s76, %s92
      %p94 = scmp.eq.s32.totalorder %s21, 0
      %p95 = por %p93, %p94
      %p96 = scmp.le.s32.totalorder 1, %s15
      %p97 = scmp.lt.s32.totalorder %s15, 3
      %p98 = pnand %p96, %p97
      %p99 = pneg %p98
      // Predicated region
      $region9: #{tpu_custom_call.1} parent=5 // pred_check
        _
      $region10: #{tpu_custom_call.1} parent=5 // pred_check_branch
        %101 = sbr.rel (%p98) target = $region12
      $region11: #{tpu_custom_call.1} parent=5 // pred_region
        %s102 = ssub.s32 %s15, 1
        // Predicated region
        $region13: #{tpu_custom_call.1} parent=11 // pred_check
          %p103 = pneg %p62
        $region14: #{tpu_custom_call.1} parent=11 // pred_check_branch
          %105 = sbr.rel (%p103) target = $region16
        $region15: #{tpu_custom_call.1} parent=11 // pred_region
          %s107 = ssub.s32 3072, 3072
          %108 = vsyncadd [#allocation6], %s107
          %s109 = sshll.u32 [#allocation5], 4
          %s110 = int_to_ptr.vmem [resolvable:$true] %s109
          %115 = dma.hbm_to_vmem [thread:$0]  %s1, 3072, %s110, [#allocation6], 128, 128, 8
        $region16: #{tpu_custom_call.1} parent=11 // pred_fallthru
          _
      $region12: #{tpu_custom_call.1} parent=5 // pred_fallthru
        _
      %p116 = scmp.lt.s32.totalorder %s15, 2
      // Predicated region
      $region17: #{tpu_custom_call.1} parent=5 // pred_check
        %p117 = pneg %p116
      $region18: #{tpu_custom_call.1} parent=5 // pred_check_branch
        %119 = sbr.rel (%p117) target = $region20
      $region19: #{tpu_custom_call.1} parent=5 // pred_region
        // Predicated region
        $region21: #{tpu_custom_call.1} parent=19 // pred_check
          %p120 = pneg %p35
        $region22: #{tpu_custom_call.1} parent=19 // pred_check_branch
          %122 = sbr.rel (%p120) target = $region24
        $region23: #{tpu_custom_call.1} parent=19 // pred_region
          %s123 = sand.u32 %s25, 1
          %s124 = scalar_lea.sflag [#allocation3], %s123
          %s125 = sand.u32 %s25, 1
          %s126 = smul.addr %s125, 16
          %s127 = scalar_lea.vmem [#allocation2], %s126
          %s129 = ssub.s32 256, 256
          %130 = vsyncadd %s124, %s129
          %s131 = smul.addr %s15, 2
          %s132 = smul.addr %s131, 128
          %s133 = scalar_lea.hbm %s0, %s132
          %s135 = sshll.u32 %s127, 4
          %s136 = int_to_ptr.vmem [resolvable:$true] %s135
          %138 = dma.hbm_to_vmem [thread:$0]  %s133, 256, %s136, %s124
        $region24: #{tpu_custom_call.1} parent=19 // pred_fallthru
          _
      $region20: #{tpu_custom_call.1} parent=5 // pred_fallthru
        _
      %p139 = scmp.le.s32.totalorder 1, %s15
      %p140 = scmp.lt.s32.totalorder %s15, 3
      %p141 = pnand %p139, %p140
      %p142 = pneg %p141
      // Predicated region
      $region25: #{tpu_custom_call.1} parent=5 // pred_check
        _
      $region26: #{tpu_custom_call.1} parent=5 // pred_check_branch
        %144 = sbr.rel (%p141) target = $region28
      $region27: #{tpu_custom_call.1} parent=5 // pred_region
        %s145 = ssub.s32 %s15, 1
        %s146 = sand.u32 %s28, 1
        %s147 = scalar_lea.sflag [#allocation3], %s146
        %s148 = sand.u32 %s28, 1
        %s149 = smul.addr %s148, 16
        %s150 = scalar_lea.vmem [#allocation2], %s149
        // Predicated region
        $region29: #{tpu_custom_call.1} parent=27 // pred_check
          %p151 = pneg %p41
        $region30: #{tpu_custom_call.1} parent=27 // pred_check_branch
          %153 = sbr.rel (%p151) target = $region32
        $region31: #{tpu_custom_call.1} parent=27 // pred_region
          %154 = dma.done %s147, 256
        $region32: #{tpu_custom_call.1} parent=27 // pred_fallthru
          _
        // Predicated region
        $region33: #{tpu_custom_call.1} parent=27 // pred_check
          %p155 = pneg %p62
        $region34: #{tpu_custom_call.1} parent=27 // pred_check_branch
          %157 = sbr.rel (%p155) target = $region36
        $region35: #{tpu_custom_call.1} parent=27 // pred_region
          %158 = dma.done [#allocation6], 3072
        $region36: #{tpu_custom_call.1} parent=27 // pred_fallthru
          _
        %s159 = sand.u32 %s28, 1
        %s160 = scalar_lea.sflag [#allocation3], %s159
        %s161 = sand.u32 %s28, 1
        %s162 = smul.addr %s161, 16
        %s163 = scalar_lea.vmem [#allocation2], %s162
        %p164 = pneg %p41
        %p165 = pneg %p38
        %p166 = pneg %p62
        %p167 = pneg %p59
        %p168 = pneg %p88
        %p169 = pneg %p85
        %s170 = sand.u32 %s75, 1
        %s171 = scalar_lea.sflag [#allocation4], %s170
        %s172 = sand.u32 %s75, 1
        %s173 = smul.addr %s172, 8
        %s174 = scalar_lea.vmem [#allocation7], %s173
        %v176 = vld [vmem:[%s150] sm:$0xff]
        %v177 = vld [vmem:[%s150 + $0x8] sm:$0xff]
        %v178 = vpack.c.bf16 %v176, %v176
        %v179 = vpack.c.bf16 %v177, %v177
        %v180 = vld [vmem:[#allocation5] sm:$0xff]
        %v181 = vld [vmem:[#allocation5 + $0x8] sm:$0xff]
        %v182 = vld [vmem:[#allocation5 + $0x10] sm:$0xff]
        %v183 = vld [vmem:[#allocation5 + $0x18] sm:$0xff]
        %v184 = vld [vmem:[#allocation5 + $0x20] sm:$0xff]
        %v185 = vld [vmem:[#allocation5 + $0x28] sm:$0xff]
        %v186 = vld [vmem:[#allocation5 + $0x30] sm:$0xff]
        %v187 = vld [vmem:[#allocation5 + $0x38] sm:$0xff]
        %v188 = vld [vmem:[#allocation5 + $0x40] sm:$0xff]
        %v189 = vld [vmem:[#allocation5 + $0x48] sm:$0xff]
        %v190 = vld [vmem:[#allocation5 + $0x50] sm:$0xff]
        %v191 = vld [vmem:[#allocation5 + $0x58] sm:$0xff]
        %v192 = vld [vmem:[#allocation5 + $0x60] sm:$0xff]
        %v193 = vld [vmem:[#allocation5 + $0x68] sm:$0xff]
        %v194 = vld [vmem:[#allocation5 + $0x70] sm:$0xff]
        %v195 = vld [vmem:[#allocation5 + $0x78] sm:$0xff]
        %v196 = vld [vmem:[#allocation5 + $0x80] sm:$0xff]
        %v197 = vld [vmem:[#allocation5 + $0x88] sm:$0xff]
        %v198 = vld [vmem:[#allocation5 + $0x90] sm:$0xff]
        %v199 = vld [vmem:[#allocation5 + $0x98] sm:$0xff]
        %v200 = vld [vmem:[#allocation5 + $0xa0] sm:$0xff]
        %v201 = vld [vmem:[#allocation5 + $0xa8] sm:$0xff]
        %v202 = vld [vmem:[#allocation5 + $0xb0] sm:$0xff]
        %v203 = vld [vmem:[#allocation5 + $0xb8] sm:$0xff]
        %v204 = vpack.c.bf16 %v181, %v180
        %v205 = vpack.c.bf16 %v183, %v182
        %v206 = vpack.c.bf16 %v185, %v184
        %v207 = vpack.c.bf16 %v187, %v186
        %v208 = vpack.c.bf16 %v189, %v188
        %v209 = vpack.c.bf16 %v191, %v190
        %v210 = vpack.c.bf16 %v193, %v192
        %v211 = vpack.c.bf16 %v195, %v194
        %v212 = vpack.c.bf16 %v197, %v196
        %v213 = vpack.c.bf16 %v199, %v198
        %v214 = vpack.c.bf16 %v201, %v200
        %v215 = vpack.c.bf16 %v203, %v202
        %vm216 = vcmask 523264
        %v218 = vsel %vm216, %v179, 0
        %220 = vmatprep.subr.bf16.mxu0 0
        %221 = vmatpush1.bf16.msra.mxu0 %v211
        %222 = vmatprep.subr.bf16.mxu0 0
        %223 = vmatpush1.bf16.msra.mxu0 %v210
        %224 = vmatprep.subr.bf16.mxu0 0
        %225 = vmatpush1.bf16.msra.mxu0 %v209
        %226 = vmatprep.subr.bf16.mxu0 0
        %227 = vmatpush1.bf16.msra.mxu0 %v208
        %228 = vmatprep.subr.bf16.mxu0 0
        %229 = vmatpush1.bf16.msra.mxu0 %v207
        %230 = vmatprep.subr.bf16.mxu0 0
        %231 = vmatpush1.bf16.msra.mxu0 %v206
        %232 = vmatprep.subr.bf16.mxu0 0
        %233 = vmatpush1.bf16.msra.mxu0 %v205
        %234 = vmatprep.subr.bf16.mxu0 0
        %235 = vmatpush1.bf16.msra.mxu0 %v204
        %236 = vmatprep.subr.bf16.mxu0 0
        %237 = vmatpush2.bf16.msra.mxu0 0
        %238 = vmatprep.subr.bf16.mxu0 0
        %239 = vmatpush2.bf16.msra.mxu0 0
        %240 = vmatprep.subr.bf16.mxu0 0
        %241 = vmatpush2.bf16.msra.mxu0 0
        %242 = vmatprep.subr.bf16.mxu0 0
        %243 = vmatpush2.bf16.msra.mxu0 0
        %244 = vmatprep.subr.bf16.mxu0 0
        %245 = vmatpush2.bf16.msra.mxu0 %v215
        %246 = vmatprep.subr.bf16.mxu0 0
        %247 = vmatpush2.bf16.msra.mxu0 %v214
        %248 = vmatprep.subr.bf16.mxu0 0
        %249 = vmatpush2.bf16.msra.mxu0 %v213
        %250 = vmatprep.subr.bf16.mxu0 0
        %251 = vmatpush2.bf16.msra.mxu0 %v212
        %252 = vmatprep.mubr.bf16.mxu0 %v218
        %253 = vmatmul.mubr.bf16.gmra.mxu0 %v178
        %v254 = vpop.f32.mrf.mxu0
        %v255 = vadd.f32 0.0, %v254
        %v256 = vpop.f32.mrf.mxu0
        %v257 = vpop.f32.mrf.mxu0
        %v258 = vpop.f32.mrf.mxu0
        %259 = vdwg.mxu0
        %v260 = vmul.f32 %v255, 0.07216878
        %v261 = vpack.c.bf16 %v260, %v260
        %v262 = vpack.c.bf16 %v255, %v255
        %264 = vrot.lane.b32.xlu0 %v261, 96
        %v265 = vpop.permute.xlu0 %264
        %vm266 = vcmask 261120
        %v268 = vsel %vm266, %v265, 0
        %v271 = vsel %vm266, %v262, 0
        %273 = vmatprep.subr.bf16.mxu0 0
        %274 = vmatpush1.bf16.xpose.msra.mxu0 0
        %275 = vmatprep.subr.bf16.mxu0 0
        %276 = vmatpush1.bf16.xpose.msra.mxu0 0
        %277 = vmatprep.subr.bf16.mxu0 0
        %278 = vmatpush1.bf16.xpose.msra.mxu0 0
        %279 = vmatprep.subr.bf16.mxu0 0
        %280 = vmatpush1.bf16.xpose.msra.mxu0 0
        %281 = vmatprep.subr.bf16.mxu0 0
        %282 = vmatpush1.bf16.xpose.msra.mxu0 0
        %283 = vmatprep.subr.bf16.mxu0 0
        %284 = vmatpush1.bf16.xpose.msra.mxu0 0
        %285 = vmatprep.subr.bf16.mxu0 0
        %286 = vmatpush1.bf16.xpose.msra.mxu0 0
        %287 = vmatprep.subr.bf16.mxu0 0
        %288 = vmatpush1.bf16.xpose.msra.mxu0 %v271
        %289 = vmatprep.subr.bf16.mxu0 0
        %290 = vmatpush2.bf16.xpose.msra.mxu0 0
        %291 = vmatprep.subr.bf16.mxu0 0
        %292 = vmatpush2.bf16.xpose.msra.mxu0 0
        %293 = vmatprep.subr.bf16.mxu0 0
        %294 = vmatpush2.bf16.xpose.msra.mxu0 0
        %295 = vmatprep.subr.bf16.mxu0 0
        %296 = vmatpush2.bf16.xpose.msra.mxu0 0
        %297 = vmatprep.subr.bf16.mxu0 0
        %298 = vmatpush2.bf16.xpose.msra.mxu0 0
        %299 = vmatprep.subr.bf16.mxu0 0
        %300 = vmatpush2.bf16.xpose.msra.mxu0 0
        %301 = vmatprep.subr.bf16.mxu0 0
        %302 = vmatpush2.bf16.xpose.msra.mxu0 0
        %303 = vmatprep.subr.bf16.mxu0 0
        %304 = vmatpush2.bf16.xpose.msra.mxu0 0
        %305 = vmatprep.mubr.bf16.mxu0 0
        %306 = vmatmul.mubr.bf16.gmra.mxu0 %v268
        %v307 = vpop.f32.mrf.mxu0
        %v308 = vadd.f32 0.0, %v307
        %v309 = vpop.f32.mrf.mxu0
        %v310 = vpop.f32.mrf.mxu0
        %v311 = vpop.f32.mrf.mxu0
        %312 = vdwg.mxu0
        %v313 = vlaneseq
        %v314 = vshrl.u32 %v313, 7
        %v315 = vlaneseq
        %v316 = vand.u32 %v315, 127
        %vm317 = vcmp.le.s32.totalorder %v316, %v314
        %v318 = vsel %vm317, %v308, -1e+30
        %vm319 = vcmask 64512
        %v320 = vsel %vm319, %v318, -inf
        %v321 = vrot.slane %v320, 4
        %v322 = vmax.f32 %v320, %v321
        %v323 = vrot.slane %v322, 2
        %v324 = vmax.f32 %v322, %v323
        %v325 = vrot.slane %v324, 1
        %v326 = vmax.f32 %v324, %v325
        %v327 = vsub.f32 %v318, %v326
        %v328 = vmul.f32 %v327, 1.442695
        %v329 = vpow.pop %v328
        %v330 = vsel %vm319, %v329, 0.0
        %v331 = vrot.slane %v330, 4
        %v332 = vadd.f32 %v330, %v331
        %v333 = vrot.slane %v332, 2
        %v334 = vadd.f32 %v332, %v333
        %v335 = vrot.slane %v334, 1
        %v336 = vadd.f32 %v334, %v335
        %v337 = vrcp.pop %v336
        %v338 = vmul.f32 %v329, %v337
        %v339 = vpack.c.bf16 %v338, %v338
        %341 = vrot.lane.b32.xlu0 %v262, 64
        %v342 = vpop.permute.xlu0 %341
        %v344 = vsel %vm319, %v339, 0
        %vm346 = vcmask 1043456
        %v348 = vsel %vm346, %v342, 0
        %350 = vmatprep.subr.bf16.mxu0 0
        %351 = vmatpush1.bf16.msra.mxu0 0
        %352 = vmatprep.subr.bf16.mxu0 0
        %353 = vmatpush1.bf16.msra.mxu0 0
        %354 = vmatprep.subr.bf16.mxu0 0
        %355 = vmatpush1.bf16.msra.mxu0 0
        %356 = vmatprep.subr.bf16.mxu0 0
        %357 = vmatpush1.bf16.msra.mxu0 0
        %358 = vmatprep.subr.bf16.mxu0 0
        %359 = vmatpush1.bf16.msra.mxu0 0
        %360 = vmatprep.subr.bf16.mxu0 0
        %361 = vmatpush1.bf16.msra.mxu0 0
        %362 = vmatprep.subr.bf16.mxu0 0
        %363 = vmatpush1.bf16.msra.mxu0 0
        %364 = vmatprep.subr.bf16.mxu0 0
        %365 = vmatpush1.bf16.msra.mxu0 %v348
        %366 = vmatprep.subr.bf16.mxu0 0
        %367 = vmatpush2.bf16.msra.mxu0 0
        %368 = vmatprep.subr.bf16.mxu0 0
        %369 = vmatpush2.bf16.msra.mxu0 0
        %370 = vmatprep.subr.bf16.mxu0 0
        %371 = vmatpush2.bf16.msra.mxu0 0
        %372 = vmatprep.subr.bf16.mxu0 0
        %373 = vmatpush2.bf16.msra.mxu0 0
        %374 = vmatprep.subr.bf16.mxu0 0
        %375 = vmatpush2.bf16.msra.mxu0 0
        %376 = vmatprep.subr.bf16.mxu0 0
        %377 = vmatpush2.bf16.msra.mxu0 0
        %378 = vmatprep.subr.bf16.mxu0 0
        %379 = vmatpush2.bf16.msra.mxu0 0
        %380 = vmatprep.subr.bf16.mxu0 0
        %381 = vmatpush2.bf16.msra.mxu0 0
        %382 = vmatprep.mubr.bf16.mxu0 0
        %383 = vmatmul.mubr.bf16.gmra.mxu0 %v344
        %v384 = vpop.f32.mrf.mxu0
        %v385 = vadd.f32 0.0, %v384
        %v386 = vpop.f32.mrf.mxu0
        %v387 = vpop.f32.mrf.mxu0
        %v388 = vpop.f32.mrf.mxu0
        %389 = vdwg.mxu0
        %390 = vst.msk [vmem:[%s174] sm:$0xff] %vm266, %v385
        %s391 = sand.u32 %s75, 1
        %s392 = scalar_lea.sflag [#allocation4], %s391
        %s393 = sand.u32 %s75, 1
        %s394 = smul.addr %s393, 8
        %s395 = scalar_lea.vmem [#allocation7], %s394
        // Predicated region
        $region37: #{tpu_custom_call.1} parent=27 // pred_check
          %p396 = pneg %p85
        $region38: #{tpu_custom_call.1} parent=27 // pred_check_branch
          %398 = sbr.rel (%p396) target = $region40
        $region39: #{tpu_custom_call.1} parent=27 // pred_region
          %s400 = ssub.s32 128, 128
          %401 = vsyncadd %s392, %s400
          %s402 = smul.addr %s20, 128
          %s403 = scalar_lea.hbm %s2, %s402
          %s405 = sshll.u32 %s395, 4
          %s406 = int_to_ptr.vmem [resolvable:$true] %s405
          %408 = dma.vmem_to_hbm [thread:$0]  %s406, 128, %s403, %s392
        $region40: #{tpu_custom_call.1} parent=27 // pred_fallthru
          _
      $region28: #{tpu_custom_call.1} parent=5 // pred_fallthru
        _
      %p409 = scmp.le.s32.totalorder 2, %s15
      // Predicated region
      $region41: #{tpu_custom_call.1} parent=5 // pred_check
        %p410 = pneg %p409
      $region42: #{tpu_custom_call.1} parent=5 // pred_check_branch
        %412 = sbr.rel (%p410) target = $region44
      $region43: #{tpu_custom_call.1} parent=5 // pred_region
        %s413 = ssub.s32 %s15, 2
        // Predicated region
        $region45: #{tpu_custom_call.1} parent=43 // pred_check
          %p414 = pneg %p91
        $region46: #{tpu_custom_call.1} parent=43 // pred_check_branch
          %416 = sbr.rel (%p414) target = $region48
        $region47: #{tpu_custom_call.1} parent=43 // pred_region
          %s417 = sand.u32 %s76, 1
          %s418 = scalar_lea.sflag [#allocation4], %s417
          %s419 = sand.u32 %s76, 1
          %s420 = smul.addr %s419, 8
          %s421 = scalar_lea.vmem [#allocation7], %s420
          %422 = dma.done %s418, 128
        $region48: #{tpu_custom_call.1} parent=43 // pred_fallthru
          _
      $region44: #{tpu_custom_call.1} parent=5 // pred_fallthru
        _
    $region6: #{tpu_custom_call.1} parent=1 // loop_footer
      %s19 = sadd.s32 1, %s15
    $region7: #{tpu_custom_call.1} parent=1 // loop_footer_branch
      %14 = sbr.rel target = $region3
    $region8: #{tpu_custom_call.1} parent=1 // loop_exit
      _
    %423 = vsyncpa [#allocation3], 1
    %s424 = scalar_lea.sflag [#allocation3], 1
    %425 = vsyncpa %s424, 1
    %426 = vsyncpa [#allocation6], 1
    %427 = vsyncpa [#allocation4], 1
    %s428 = scalar_lea.sflag [#allocation4], 1
    %429 = vsyncpa %s428, 1

</llo_original>
